<compile_context>
chip_gen: v6e
topology: v6e:2x2x1
jax: 0.10.0
libtpu: 0.0.40
codegen_flags: <defaults>
</compile_context>

<pallas_src>
import functools

import jax
import jax.numpy as jnp
from jax.experimental import pallas as pl
from jax.experimental.pallas import tpu as pltpu

LANES = 128
MAX_BLOCK_ROWS = 4096  # 4096 x 128 f32 = 2 MiB per input block


def addrelu_kernel(scale_ref, a_ref, b_ref, o_ref, *, qmin, qmax):
    # scale_ref (SMEM, f32[2]) = [2**a_shift, 2**b_shift]; qmin/qmax are
    # compile-time constants (module buffers: 0 and 2**bits - 1).
    sa = scale_ref[0]
    sb = scale_ref[1]
    out = jnp.floor(a_ref[...] * sa + b_ref[...] * sb)
    out = jnp.minimum(jnp.maximum(out, qmin), qmax)
    o_ref[...] = out.astype(o_ref.dtype)


def add_relu_forward(a_val, a_exp, b_val, b_exp, delta_out,
                     qmin=0.0, qmax=255.0, out_dtype=None,
                     max_block_rows=MAX_BLOCK_ROWS):
    """Eval-mode AddRELU forward. Returns (out, rexp).

    out_dtype=None (default) picks bf16 when exact (|qmin|,|qmax| <= 256,
    i.e. bits <= 8) to halve write-back HBM traffic, else float32. Pass
    jnp.float32 explicitly to force the PyTorch-module output dtype.
    """
    assert a_val.shape == b_val.shape, "ADD: input shapes not identical"
    orig_shape = a_val.shape
    total = a_val.size
    qmin = float(qmin)
    qmax = float(qmax)

    # Output dtype selection (bf16 is exact for integers with magnitude <= 256).
    if out_dtype is None:
        out_dtype = (jnp.bfloat16 if (qmax <= 256.0 and qmin >= -256.0)
                     else jnp.float32)
    elif jnp.dtype(out_dtype) == jnp.dtype(jnp.bfloat16):
        assert qmax <= 256.0 and qmin >= -256.0, \
            "bf16 write-back only exact for |q| <= 256 (bits <= 8)"

    # Scalar glue (matches the PyTorch buffer math; size=(1,) broadcast scalars).
    rexp = jnp.log2(delta_out)                               # (1,)
    scale_a = jnp.exp2(jnp.round(a_exp - rexp)).reshape(-1)[0]
    scale_b = jnp.exp2(jnp.round(b_exp - rexp)).reshape(-1)[0]
    scales = jnp.stack([scale_a, scale_b]).astype(jnp.float32)

    # Lane-dense slab: rows of 128 lanes. No block-multiple padding — Pallas
    # masks the ragged last block.
    rows = -(-total // LANES)                                # cdiv
    padded = rows * LANES
    block_rows = rows if rows <= max_block_rows else max_block_rows
    grid = (-(-rows // block_rows),)

    def to_slab(x):
        if x.dtype != jnp.float32:
            x = x.astype(jnp.float32)
        if padded == total:
            return x.reshape(rows, LANES)                    # zero-cost view
        flat = jnp.pad(x.reshape(-1), (0, padded - total))   # only if ragged lanes
        return flat.reshape(rows, LANES)

    a2d = to_slab(a_val)
    b2d = to_slab(b_val)

    kernel = functools.partial(addrelu_kernel, qmin=qmin, qmax=qmax)

    out_itemsize = jnp.dtype(out_dtype).itemsize
    cost = pl.CostEstimate(
        flops=6 * padded,                                    # 2 mul + add + floor + clamp
        transcendentals=0,
        bytes_accessed=8 * padded + out_itemsize * padded,
    )

    out2d = pl.pallas_call(
        kernel,
        out_shape=jax.ShapeDtypeStruct((rows, LANES), out_dtype),
        grid_spec=pltpu.PrefetchScalarGridSpec(
            num_scalar_prefetch=1,                           # scales -> SMEM
            grid=grid,
            in_specs=[
                pl.BlockSpec((block_rows, LANES), lambda i, s: (i, 0)),  # a
                pl.BlockSpec((block_rows, LANES), lambda i, s: (i, 0)),  # b
            ],
            out_specs=pl.BlockSpec((block_rows, LANES), lambda i, s: (i, 0)),
        ),
        compiler_params=pltpu.CompilerParams(
            dimension_semantics=("parallel",),               # v7x: shard over 2 TCs
            vmem_limit_bytes=32 << 20,                       # headroom for 2 MiB blocks
        ),
        cost_estimate=cost,
    )(scales, a2d, b2d)

    if padded == total:
        out = out2d.reshape(orig_shape)
    else:
        out = out2d.reshape(-1)[:total].reshape(orig_shape)
    return out, rexp


def _reference(a_val, a_exp, b_val, b_exp, delta_out, qmin, qmax):
    r = jnp.log2(delta_out)
    va = a_val * jnp.exp2(jnp.round(a_exp - r))
    vb = b_val * jnp.exp2(jnp.round(b_exp - r))
    return jnp.clip(jnp.floor(va + vb), qmin, qmax)


if __name__ == "__main__":
    # Deterministic "module parameters" (Hidden_ReLU with bits=8, size=(1,)).
    bits = 8
    qmin = 0.0                                   # nn.init.constant_(self.min, 0)
    qmax = float(2 ** bits - 1)                  # nn.init.constant_(self.max, 255)
    delta_out = jnp.full((1,), 2.0 ** -4, jnp.float32)  # synthetic quant delta
    a_exp = jnp.full((1,), -6.0, jnp.float32)    # in_a rexp (log2 of input delta)
    b_exp = jnp.full((1,), -5.0, jnp.float32)    # in_b rexp

    key = jax.random.PRNGKey(0)
    ka, kb, kc, kd = jax.random.split(key, 4)

    # Case 1: NCHW shape whose flat size is a 128-multiple (zero-copy path),
    # default (bf16) write-back.
    shape = (2, 4, 16, 16)
    a_val = jnp.round(jax.random.normal(ka, shape, jnp.float32) * 200.0)
    b_val = jnp.round(jax.random.normal(kb, shape, jnp.float32) * 200.0)
    ref = _reference(a_val, a_exp, b_val, b_exp, delta_out, qmin, qmax)

    out, rexp = add_relu_forward(a_val, a_exp, b_val, b_exp, delta_out, qmin, qmax)
    out = jax.block_until_ready(out)
    assert out.dtype == jnp.bfloat16
    assert jnp.allclose(out.astype(jnp.float32), ref), "mismatch (bf16 default)"

    # Explicit float32 output (exact module dtype).
    out_f32, _ = add_relu_forward(a_val, a_exp, b_val, b_exp, delta_out,
                                  qmin, qmax, out_dtype=jnp.float32)
    out_f32 = jax.block_until_ready(out_f32)
    assert jnp.allclose(out_f32, ref), "mismatch (f32 output)"

    # Case 2: ragged lanes (total % 128 != 0) + ragged last grid block
    # (small max_block_rows forces a multi-step grid that doesn't divide rows).
    shape2 = (2, 3, 7, 5)                        # 210 elements -> 2 rows, lane pad
    a2 = jnp.round(jax.random.normal(kc, shape2, jnp.float32) * 200.0)
    b2 = jnp.round(jax.random.normal(kd, shape2, jnp.float32) * 200.0)
    ref2 = _reference(a2, a_exp, b2, b_exp, delta_out, qmin, qmax)
    out2, _ = add_relu_forward(a2, a_exp, b2, b_exp, delta_out, qmin, qmax)
    out2 = jax.block_until_ready(out2)
    assert jnp.allclose(out2.astype(jnp.float32), ref2), "mismatch (ragged lanes)"

    shape3 = (2, 3, 16, 16)                      # 1536 elems -> 12 rows
    a3 = jnp.round(jax.random.normal(kc, shape3, jnp.float32) * 200.0)
    b3 = jnp.round(jax.random.normal(kd, shape3, jnp.float32) * 200.0)
    ref3 = _reference(a3, a_exp, b3, b_exp, delta_out, qmin, qmax)
    out3, _ = add_relu_forward(a3, a_exp, b3, b_exp, delta_out, qmin, qmax,
                               max_block_rows=8)  # grid=(2,), ragged last block
    out3 = jax.block_until_ready(out3)
    assert jnp.allclose(out3.astype(jnp.float32), ref3), "mismatch (ragged grid)"

    # TODO(synk): training-mode path (set_quant + Quant.forward) depends on the
    # unshown Quant base class; only the eval-mode inference path is implemented.
    print("KERNEL_OK")
</pallas_src>

<mosaic_0001>
module attributes {stable_mosaic.version = 11 : i64} {
  func.func @addrelu_kernel(%arg0: i32, %arg1: memref<2xf32, #tpu.memory_space<smem>>, %arg2: memref<16x128xf32, #tpu.memory_space<vmem>>, %arg3: memref<16x128xf32, #tpu.memory_space<vmem>>, %arg4: memref<16x128xbf16, #tpu.memory_space<vmem>>) attributes {dimension_semantics = [#tpu.dimension_semantics<parallel>], iteration_bounds = array<i64: 1>, scalar_prefetch = 1 : i64, scratch_operands = 0 : i64, tpu.core_type = #tpu.core_type<tc>, window_params = [{transform_indices = @transform_0, window_bounds = array<i64: 16, 128>}, {transform_indices = @transform_1, window_bounds = array<i64: 16, 128>}, {transform_indices = @transform_2, window_bounds = array<i64: 16, 128>}]} {
    %c0 = arith.constant 0 : index
    %0 = memref.load %arg1[%c0] : memref<2xf32, #tpu.memory_space<smem>>
    %c1 = arith.constant 1 : index
    %1 = memref.load %arg1[%c1] : memref<2xf32, #tpu.memory_space<smem>>
    %c0_0 = arith.constant 0 : index
    %c0_1 = arith.constant 0 : index
    %2 = vector.load %arg2[%c0_0, %c0_1] : memref<16x128xf32, #tpu.memory_space<vmem>>, vector<16x128xf32>
    %3 = vector.broadcast %0 : f32 to vector<16x128xf32>
    %4 = arith.mulf %2, %3 : vector<16x128xf32>
    %c0_2 = arith.constant 0 : index
    %c0_3 = arith.constant 0 : index
    %5 = vector.load %arg3[%c0_2, %c0_3] : memref<16x128xf32, #tpu.memory_space<vmem>>, vector<16x128xf32>
    %6 = vector.broadcast %1 : f32 to vector<16x128xf32>
    %7 = arith.mulf %5, %6 : vector<16x128xf32>
    %8 = arith.addf %4, %7 : vector<16x128xf32>
    %9 = math.floor %8 : vector<16x128xf32>
    %cst = arith.constant 0.000000e+00 : f32
    %10 = vector.broadcast %cst : f32 to vector<16x128xf32>
    %11 = arith.maximumf %9, %10 : vector<16x128xf32>
    %cst_4 = arith.constant 2.550000e+02 : f32
    %12 = vector.broadcast %cst_4 : f32 to vector<16x128xf32>
    %13 = arith.minimumf %11, %12 : vector<16x128xf32>
    %14 = arith.truncf %13 : vector<16x128xf32> to vector<16x128xbf16>
    %c0_5 = arith.constant 0 : index
    %c0_6 = arith.constant 0 : index
    %15 = vector.load %arg4[%c0_5, %c0_6] : memref<16x128xbf16, #tpu.memory_space<vmem>>, vector<16x128xbf16>
    tpu.vector_store %arg4[%c0_5, %c0_6], %14 {strides = array<i32>} : memref<16x128xbf16, #tpu.memory_space<vmem>>, vector<16x128xbf16>,
    return
  }
  func.func @transform_0(%arg0: i32, %arg1: memref<2xf32, #tpu.memory_space<smem>>) -> (i32, i32) {
    %c0_i32 = arith.constant 0 : i32
    %c0_i32_0 = arith.constant 0 : i32
    return %arg0, %c0_i32 : i32, i32
  }
  func.func @transform_1(%arg0: i32, %arg1: memref<2xf32, #tpu.memory_space<smem>>) -> (i32, i32) {
    %c0_i32 = arith.constant 0 : i32
    %c0_i32_0 = arith.constant 0 : i32
    return %arg0, %c0_i32 : i32, i32
  }
  func.func @transform_2(%arg0: i32, %arg1: memref<2xf32, #tpu.memory_space<smem>>) -> (i32, i32) {
    %c0_i32 = arith.constant 0 : i32
    %c0_i32_0 = arith.constant 0 : i32
    return %arg0, %c0_i32 : i32, i32
  }
}

</mosaic_0001>

<llo_original>
// kernel: tpu_custom_call.1
$region0: #{tpu_custom_call.1}
  #allocation0 [shape = 'u32[]', space=smem, size = 0x4, offset = 0x4, fixed_abs, tag = 'smem constant byte address 0x4 - core index']
  #allocation1 [shape = 'u32[144,128]{1,0:T(1,128)}', space=vmem, size = 0x12000, scoped, tag = 'internal scratch']
  #allocation2 [shape = 's32[1]{0}', space=sflag, size = 0x4, scoped, tag = 'scoped memory for tpu_custom_call.1']
  #allocation3 [shape = 'u8[512]{0}', space=smem, size = 0x200, scoped, tag = 'prefetched SMEM operand 0']
  %s0 = inlined_call_operand.hbm [shape: f32[2], index: 0, kind: input, shape index: {}]
  %s1 = inlined_call_operand.hbm [shape: f32[16,128], index: 1, kind: input, shape index: {}]
  %s2 = inlined_call_operand.hbm [shape: f32[16,128], index: 2, kind: input, shape index: {}]
  %s3 = inlined_call_operand.hbm [shape: bf16[16,128], index: 3, kind: output, shape index: {}]
  %s4 = sld [smem:[#allocation0]]
  $region26: #{tpu_custom_call.1} parent=0
    _
  %s6 = ssub.s32 1, %s4
  %s7 = scalar_select 0, %s6, %s4
  %9 = dma.hbm_to_smem %s0, 16, [#allocation3], [#allocation2]
  %10 = dma.done [#allocation2], 16
  %11 = sfence
  $region1: #{tpu_custom_call.1} parent=0
    #allocation4 [shape = 'u8[8192]{0}', space=vmem, size = 0x2000, scoped, tag = 'input window, operand 1, single buffered']
    #allocation5 [shape = 's32[1]{0}', space=sflag, size = 0x4, scoped, tag = 'scoped memory for tpu_custom_call.1']
    #allocation6 [shape = 's32[1]{0}', space=sflag, size = 0x4, scoped, tag = 'scoped memory for tpu_custom_call.1']
    #allocation7 [shape = 'u8[8192]{0}', space=vmem, size = 0x2000, scoped, tag = 'input window, operand 2, single buffered']
    #allocation8 [shape = 's32[1]{0}', space=sflag, size = 0x4, scoped, tag = 'scoped memory for tpu_custom_call.1']
    #allocation9 [shape = 'u8[4096]{0}', space=vmem, size = 0x1000, scoped, tag = 'output window, operand 0, single buffered']
    %12 = vsyncpa [#allocation5], 0
    %13 = vsyncpa [#allocation8], 0
    %14 = vsyncpa [#allocation6], 0
    // Predicated region
    $region2: #{tpu_custom_call.1} parent=1 // pred_check
      _
    $region3: #{tpu_custom_call.1} parent=1 // pred_check_branch
      %16 = sbr.rel (0) target = $region5
    $region4: #{tpu_custom_call.1} parent=1 // pred_region
      %s18 = ssub.s32 256, 256
      %19 = vsyncadd [#allocation5], %s18
      %s20 = sshll.u32 [#allocation4], 4
      %s21 = int_to_ptr.vmem [resolvable:$true] %s20
      %26 = dma.hbm_to_vmem [thread:$0]  %s1, 256, %s21, [#allocation5], 128, 128, 8
    $region5: #{tpu_custom_call.1} parent=1 // pred_fallthru
      _
    // Predicated region
    $region6: #{tpu_custom_call.1} parent=1 // pred_check
      _
    $region7: #{tpu_custom_call.1} parent=1 // pred_check_branch
      %28 = sbr.rel (0) target = $region9
    $region8: #{tpu_custom_call.1} parent=1 // pred_region
      %s30 = ssub.s32 256, 256
      %31 = vsyncadd [#allocation8], %s30
      %s32 = sshll.u32 [#allocation7], 4
      %s33 = int_to_ptr.vmem [resolvable:$true] %s32
      %38 = dma.hbm_to_vmem [thread:$0]  %s2, 256, %s33, [#allocation8], 128, 128, 8
    $region9: #{tpu_custom_call.1} parent=1 // pred_fallthru
      _
    // Predicated region
    $region10: #{tpu_custom_call.1} parent=1 // pred_check
      _
    $region11: #{tpu_custom_call.1} parent=1 // pred_check_branch
      %40 = sbr.rel (0) target = $region13
    $region12: #{tpu_custom_call.1} parent=1 // pred_region
      %41 = dma.done [#allocation5], 256
    $region13: #{tpu_custom_call.1} parent=1 // pred_fallthru
      _
    // Predicated region
    $region14: #{tpu_custom_call.1} parent=1 // pred_check
      _
    $region15: #{tpu_custom_call.1} parent=1 // pred_check_branch
      %43 = sbr.rel (0) target = $region17
    $region16: #{tpu_custom_call.1} parent=1 // pred_region
      %44 = dma.done [#allocation8], 256
    $region17: #{tpu_custom_call.1} parent=1 // pred_fallthru
      _
    %s45 = sld [smem:[#allocation3]]
    %s46 = sld [smem:[#allocation3 + $0x1]]
    %v47 = vld [vmem:[#allocation4] sm:$0xff]
    %v48 = vld [vmem:[#allocation4 + $0x8] sm:$0xff]
    %v49 = vstv %s45
    %v50 = vmul.f32 %v47, %v49
    %v51 = vmul.f32 %v48, %v49
    %v52 = vld [vmem:[#allocation7] sm:$0xff]
    %v53 = vld [vmem:[#allocation7 + $0x8] sm:$0xff]
    %v54 = vstv %s46
    %v55 = vmul.f32 %v52, %v54
    %v56 = vmul.f32 %v53, %v54
    %v57 = vadd.f32 %v50, %v55
    %v58 = vadd.f32 %v51, %v56
    %v59 = vfloor.f32 %v57
    %v60 = vfloor.f32 %v58
    %v61 = vmax.f32 %v59, 0.0
    %v62 = vmax.f32 %v60, 0.0
    %v63 = vmin.f32 %v61, 255.0
    %v64 = vmin.f32 %v62, 255.0
    %v65 = vpack.c.bf16 %v64, %v63
    %v67 = vunpack.c.l.b16 %v65
    %v68 = vunpack.c.h.b16 %v65
    %v69 = vpack.c.b16 %v67, %v67
    %v70 = vpack.c.b16 %v68, %v68
    %73 = vst [vmem:[#allocation9] sm:$0xf] %v69
    %74 = vst [vmem:[#allocation9 + $0x4] sm:$0xf] %v70
    // Predicated region
    $region18: #{tpu_custom_call.1} parent=1 // pred_check
      _
    $region19: #{tpu_custom_call.1} parent=1 // pred_check_branch
      %76 = sbr.rel (0) target = $region21
    $region20: #{tpu_custom_call.1} parent=1 // pred_region
      %s78 = ssub.s32 128, 128
      %79 = vsyncadd [#allocation6], %s78
      %s80 = sshll.u32 [#allocation9], 4
      %s81 = int_to_ptr.vmem [resolvable:$true] %s80
      %86 = dma.vmem_to_hbm [thread:$0]  %s81, 128, %s3, [#allocation6], 64, 64, 4
    $region21: #{tpu_custom_call.1} parent=1 // pred_fallthru
      _
    // Predicated region
    $region22: #{tpu_custom_call.1} parent=1 // pred_check
      _
    $region23: #{tpu_custom_call.1} parent=1 // pred_check_branch
      %88 = sbr.rel (0) target = $region25
    $region24: #{tpu_custom_call.1} parent=1 // pred_region
      %89 = dma.done [#allocation6], 128
    $region25: #{tpu_custom_call.1} parent=1 // pred_fallthru
      _
    %90 = vsyncpa [#allocation5], 1
    %91 = vsyncpa [#allocation8], 1
    %92 = vsyncpa [#allocation6], 1

</llo_original>
